<compile_context>
chip_gen: v5e
topology: v5e:2x2
jax: 0.10.0
libtpu: 0.0.40
codegen_flags: <defaults>
</compile_context>

<pallas_src>
import functools
import math

import jax
import jax.numpy as jnp
from jax.experimental import pallas as pl
from jax.experimental.pallas import tpu as pltpu


def _round_up(a, b):
    return (a + b - 1) // b * b


def _lane_align(dim):
    # v6e/v7x MXU is 2x(256x256): prefer 256-aligned K/N tiles once the dim is
    # big enough; 128 keeps zero-padding small for narrow features (and is
    # fine for v5e's 4x(128x128) MXU).
    return 256 if _round_up(dim, 128) >= 256 else 128


def _fit(dim, t_max, align):
    """Aligned tile size <= t_max chosen to minimize padding of `dim`."""
    t_max = max(align, (t_max // align) * align)
    full = _round_up(dim, align)
    if full <= t_max:
        return full
    n_tiles = -(-dim // t_max)            # padding-aware split of dim
    return _round_up(-(-dim // n_tiles), align)


def _complex_linear_kernel(xr_ref, xi_ref, wr_ref, wi_ref, br_ref, bi_ref,
                           or_ref, oi_ref):
    """One (tm, tn) output-tile pair.

    The K axis (grid dim 2, 'arbitrary') accumulates directly into the
    resident f32 output tiles; the bias row is the initial value, so the
    bias add is fused for free and no scratch accumulator is needed.
    """
    @pl.when(pl.program_id(2) == 0)
    def _init():
        or_ref[...] = jnp.broadcast_to(br_ref[...], or_ref.shape)
        oi_ref[...] = jnp.broadcast_to(bi_ref[...], oi_ref.shape)

    xr = xr_ref[...]
    xi = xi_ref[...]
    wr = wr_ref[...]
    wi = wi_ref[...]

    or_ref[...] += (jnp.dot(xr, wr, preferred_element_type=jnp.float32)
                    - jnp.dot(xi, wi, preferred_element_type=jnp.float32))
    oi_ref[...] += (jnp.dot(xi, wr, preferred_element_type=jnp.float32)
                    + jnp.dot(xr, wi, preferred_element_type=jnp.float32))


@functools.partial(
    jax.jit,
    static_argnames=("tm", "tk", "tn", "out_features", "compute_dtype"))
def _complex_linear_planar(x_r, x_i, wr_p, wi_p, br_p, bi_p, *,
                           tm, tk, tn, out_features, compute_dtype):
    """Planar forward: (B, F_in) real/imag planes -> (B, F_out) planes."""
    B, F_in = x_r.shape
    Kp, Np = wr_p.shape
    cdt = jnp.dtype(compute_dtype)

    Mp = _round_up(B, tm)
    xr_p = jnp.pad(x_r.astype(cdt), ((0, Mp - B), (0, Kp - F_in)))
    xi_p = jnp.pad(x_i.astype(cdt), ((0, Mp - B), (0, Kp - F_in)))

    grid = (Mp // tm, Np // tn, Kp // tk)

    yr_p, yi_p = pl.pallas_call(
        _complex_linear_kernel,
        out_shape=[jax.ShapeDtypeStruct((Mp, Np), jnp.float32),
                   jax.ShapeDtypeStruct((Mp, Np), jnp.float32)],
        grid_spec=pltpu.PrefetchScalarGridSpec(
            num_scalar_prefetch=0,
            grid=grid,
            in_specs=[
                pl.BlockSpec((tm, tk), lambda i, j, k: (i, k)),   # x_r
                pl.BlockSpec((tm, tk), lambda i, j, k: (i, k)),   # x_i
                pl.BlockSpec((tk, tn), lambda i, j, k: (k, j)),   # wr^T
                pl.BlockSpec((tk, tn), lambda i, j, k: (k, j)),   # wi^T
                pl.BlockSpec((1, tn), lambda i, j, k: (0, j)),    # bias_r
                pl.BlockSpec((1, tn), lambda i, j, k: (0, j)),    # bias_i
            ],
            out_specs=[
                pl.BlockSpec((tm, tn), lambda i, j, k: (i, j)),   # y_r
                pl.BlockSpec((tm, tn), lambda i, j, k: (i, j)),   # y_i
            ],
        ),
        compiler_params=pltpu.CompilerParams(
            dimension_semantics=("parallel", "parallel", "arbitrary")),
    )(xr_p, xi_p, wr_p, wi_p, br_p, bi_p)

    return yr_p[:B, :out_features], yi_p[:B, :out_features]


class ComplexLinearPallas:
    """Pallas-TPU equivalent of the PyTorch ComplexLinear forward pass.

    Weights are packed (transposed, cast, padded) ONCE at construction; each
    call only pads activations and launches one pipelined kernel that emits
    both the real and imaginary output planes.
    """

    def __init__(self, w_r, w_i, bias=None, *, compute_dtype=None,
                 tm_max=512, tk_max=1024, tn_max=512):
        assert w_r.ndim == 2 and w_r.shape == w_i.shape
        F_out, F_in = w_r.shape
        self.in_features, self.out_features = F_in, F_out

        cdt = jnp.dtype(compute_dtype) if compute_dtype is not None \
            else jnp.dtype(jnp.asarray(w_r).dtype)
        self.compute_dtype = cdt
        # bf16 packs two rows per sublane -> pad/tile the batch dim to 16s.
        self.m_align = 16 if cdt.itemsize < 4 else 8
        self.tm_max = max(self.m_align, (tm_max // self.m_align) * self.m_align)

        self.tk = _fit(F_in, tk_max, _lane_align(F_in))
        self.tn = _fit(F_out, tn_max, _lane_align(F_out))
        Kp = _round_up(F_in, self.tk)
        Np = _round_up(F_out, self.tn)

        # One-time weight / bias packing (hoisted out of the per-call path).
        self.wr_p = jnp.pad(jnp.asarray(w_r).T.astype(cdt),
                            ((0, Kp - F_in), (0, Np - F_out)))
        self.wi_p = jnp.pad(jnp.asarray(w_i).T.astype(cdt),
                            ((0, Kp - F_in), (0, Np - F_out)))
        if bias is None:
            bias = jnp.zeros((F_out, 2), jnp.float32)
        b = jnp.asarray(bias, jnp.float32)
        self.br_p = jnp.pad(b[:, 0][None, :], ((0, 0), (0, Np - F_out)))
        self.bi_p = jnp.pad(b[:, 1][None, :], ((0, 0), (0, Np - F_out)))

    def apply_planar(self, x_r, x_i):
        """Lane-dense interface: (B, F_in) planes -> (B, F_out) planes (f32)."""
        B = x_r.shape[0]
        tm = _fit(B, self.tm_max, self.m_align)
        tn = self.tn
        # v7x has 2 TensorCores sharding the 'parallel' grid axes: make sure
        # the (i, j) grid has >= 2 blocks when the shapes allow it.
        if (_round_up(B, tm) // tm == 1 and self.wr_p.shape[1] // tn == 1
                and tn % 256 == 0):
            tn //= 2
        return _complex_linear_planar(
            x_r, x_i, self.wr_p, self.wi_p, self.br_p, self.bi_p,
            tm=tm, tk=self.tk, tn=tn,
            out_features=self.out_features,
            compute_dtype=str(self.compute_dtype))

    def __call__(self, x):
        assert x.ndim == 3 and x.shape[-1] == 2
        # TODO(synk): in a full network keep real/imag as separate (B, F)
        # planes end-to-end; this (..., 2) de-interleave / re-interleave is
        # lane-sparse layout glue, not compute.
        y_r, y_i = self.apply_planar(x[:, :, 0], x[:, :, 1])
        return jnp.stack([y_r, y_i], axis=-1).astype(x.dtype)


def _reference(x, w_r, w_i, bias):
    xr, xi = x[:, :, 0], x[:, :, 1]
    real = xr @ w_r.T - xi @ w_i.T
    imag = xi @ w_r.T + xr @ w_i.T
    return jnp.stack([real, imag], axis=-1) + bias


if __name__ == "__main__":
    key = jax.random.PRNGKey(0)
    B, F_in, F_out = 8, 32, 64

    k_x, k_wr, k_wi, k_b = jax.random.split(key, 4)
    bound = 1.0 / math.sqrt(F_in)

    x = jax.random.normal(k_x, (B, F_in, 2), dtype=jnp.float32)
    w_r = jax.random.uniform(k_wr, (F_out, F_in), minval=-bound, maxval=bound,
                             dtype=jnp.float32)
    w_i = jax.random.uniform(k_wi, (F_out, F_in), minval=-bound, maxval=bound,
                             dtype=jnp.float32)
    bias = jax.random.uniform(k_b, (F_out, 2), minval=-bound, maxval=bound,
                              dtype=jnp.float32)

    ref = _reference(x, w_r, w_i, bias)

    # f32 compute path (matches PyTorch module semantics).
    layer_f32 = ComplexLinearPallas(w_r, w_i, bias)
    out_f32 = jax.block_until_ready(layer_f32(x))
    assert out_f32.shape == (B, F_out, 2)
    assert jnp.allclose(out_f32, ref, atol=1e-5, rtol=1e-5)

    # bf16 compute with f32 accumulation (MXU-native fast path).
    layer_bf16 = ComplexLinearPallas(w_r, w_i, bias, compute_dtype=jnp.bfloat16)
    out_bf16 = jax.block_until_ready(layer_bf16(x))
    assert out_bf16.shape == (B, F_out, 2)
    assert jnp.allclose(out_bf16, ref, atol=5e-2, rtol=5e-2)

    print("KERNEL_OK")
</pallas_src>

<mosaic_0001>
module attributes {stable_mosaic.version = 11 : i64} {
  func.func @_complex_linear_kernel(%arg0: i32, %arg1: i32, %arg2: i32, %arg3: memref<8x128xf32, #tpu.memory_space<vmem>>, %arg4: memref<8x128xf32, #tpu.memory_space<vmem>>, %arg5: memref<128x128xf32, #tpu.memory_space<vmem>>, %arg6: memref<128x128xf32, #tpu.memory_space<vmem>>, %arg7: memref<1x128xf32, #tpu.memory_space<vmem>>, %arg8: memref<1x128xf32, #tpu.memory_space<vmem>>, %arg9: memref<8x128xf32, #tpu.memory_space<vmem>>, %arg10: memref<8x128xf32, #tpu.memory_space<vmem>>) attributes {dimension_semantics = [#tpu.dimension_semantics<parallel>, #tpu.dimension_semantics<parallel>, #tpu.dimension_semantics<arbitrary>], iteration_bounds = array<i64: 1, 1, 1>, scalar_prefetch = 0 : i64, scratch_operands = 0 : i64, tpu.core_type = #tpu.core_type<tc>, window_params = [{transform_indices = @transform_0, window_bounds = array<i64: 8, 128>}, {transform_indices = @transform_1, window_bounds = array<i64: 8, 128>}, {transform_indices = @transform_2, window_bounds = array<i64: 128, 128>}, {transform_indices = @transform_3, window_bounds = array<i64: 128, 128>}, {transform_indices = @transform_4, window_bounds = array<i64: 1, 128>}, {transform_indices = @transform_5, window_bounds = array<i64: 1, 128>}, {transform_indices = @transform_6, window_bounds = array<i64: 8, 128>}, {transform_indices = @transform_7, window_bounds = array<i64: 8, 128>}]} {
    %c0_i32 = arith.constant 0 : i32
    %0 = arith.cmpi eq, %arg2, %c0_i32 : i32
    %1 = arith.extui %0 : i1 to i32
    %c0_i32_0 = arith.constant 0 : i32
    %2 = arith.cmpi ne, %1, %c0_i32_0 : i32
    scf.if %2 {
      %c0_19 = arith.constant 0 : index
      %c0_20 = arith.constant 0 : index
      %19 = vector.load %arg7[%c0_19, %c0_20] : memref<1x128xf32, #tpu.memory_space<vmem>>, vector<1x128xf32>
      %20 = vector.shape_cast %19 : vector<1x128xf32> to vector<1x128xf32>
      %21 = vector.broadcast %20 : vector<1x128xf32> to vector<8x128xf32>
      %c0_21 = arith.constant 0 : index
      %c0_22 = arith.constant 0 : index
      %22 = vector.load %arg9[%c0_21, %c0_22] : memref<8x128xf32, #tpu.memory_space<vmem>>, vector<8x128xf32>
      tpu.vector_store %arg9[%c0_21, %c0_22], %21 {strides = array<i32>} : memref<8x128xf32, #tpu.memory_space<vmem>>, vector<8x128xf32>,
      %c0_23 = arith.constant 0 : index
      %c0_24 = arith.constant 0 : index
      %23 = vector.load %arg8[%c0_23, %c0_24] : memref<1x128xf32, #tpu.memory_space<vmem>>, vector<1x128xf32>
      %24 = vector.shape_cast %23 : vector<1x128xf32> to vector<1x128xf32>
      %25 = vector.broadcast %24 : vector<1x128xf32> to vector<8x128xf32>
      %c0_25 = arith.constant 0 : index
      %c0_26 = arith.constant 0 : index
      %26 = vector.load %arg10[%c0_25, %c0_26] : memref<8x128xf32, #tpu.memory_space<vmem>>, vector<8x128xf32>
      tpu.vector_store %arg10[%c0_25, %c0_26], %25 {strides = array<i32>} : memref<8x128xf32, #tpu.memory_space<vmem>>, vector<8x128xf32>,
    } else {
    }
    %c0 = arith.constant 0 : index
    %c0_1 = arith.constant 0 : index
    %3 = vector.load %arg3[%c0, %c0_1] : memref<8x128xf32, #tpu.memory_space<vmem>>, vector<8x128xf32>
    %c0_2 = arith.constant 0 : index
    %c0_3 = arith.constant 0 : index
    %4 = vector.load %arg4[%c0_2, %c0_3] : memref<8x128xf32, #tpu.memory_space<vmem>>, vector<8x128xf32>
    %c0_4 = arith.constant 0 : index
    %c0_5 = arith.constant 0 : index
    %5 = vector.load %arg5[%c0_4, %c0_5] : memref<128x128xf32, #tpu.memory_space<vmem>>, vector<128x128xf32>
    %c0_6 = arith.constant 0 : index
    %c0_7 = arith.constant 0 : index
    %6 = vector.load %arg6[%c0_6, %c0_7] : memref<128x128xf32, #tpu.memory_space<vmem>>, vector<128x128xf32>
    %c0_8 = arith.constant 0 : index
    %c0_9 = arith.constant 0 : index
    %7 = vector.load %arg9[%c0_8, %c0_9] : memref<8x128xf32, #tpu.memory_space<vmem>>, vector<8x128xf32>
    %cst = arith.constant dense<0.000000e+00> : vector<8x128xf32>
    %8 = tpu.matmul %3, %5, %cst {dimension_numbers = #tpu.dot_dimension_numbers<[1], [0], [0], [1], [0, 0, 1, 1], [], []>} : vector<8x128xf32>, vector<128x128xf32>, vector<8x128xf32> -> vector<8x128xf32>
    %cst_10 = arith.constant dense<0.000000e+00> : vector<8x128xf32>
    %9 = tpu.matmul %4, %6, %cst_10 {dimension_numbers = #tpu.dot_dimension_numbers<[1], [0], [0], [1], [0, 0, 1, 1], [], []>} : vector<8x128xf32>, vector<128x128xf32>, vector<8x128xf32> -> vector<8x128xf32>
    %10 = arith.subf %8, %9 : vector<8x128xf32>
    %11 = arith.addf %7, %10 : vector<8x128xf32>
    %c0_11 = arith.constant 0 : index
    %c0_12 = arith.constant 0 : index
    %12 = vector.load %arg9[%c0_11, %c0_12] : memref<8x128xf32, #tpu.memory_space<vmem>>, vector<8x128xf32>
    tpu.vector_store %arg9[%c0_11, %c0_12], %11 {strides = array<i32>} : memref<8x128xf32, #tpu.memory_space<vmem>>, vector<8x128xf32>,
    %c0_13 = arith.constant 0 : index
    %c0_14 = arith.constant 0 : index
    %13 = vector.load %arg10[%c0_13, %c0_14] : memref<8x128xf32, #tpu.memory_space<vmem>>, vector<8x128xf32>
    %cst_15 = arith.constant dense<0.000000e+00> : vector<8x128xf32>
    %14 = tpu.matmul %4, %5, %cst_15 {dimension_numbers = #tpu.dot_dimension_numbers<[1], [0], [0], [1], [0, 0, 1, 1], [], []>} : vector<8x128xf32>, vector<128x128xf32>, vector<8x128xf32> -> vector<8x128xf32>
    %cst_16 = arith.constant dense<0.000000e+00> : vector<8x128xf32>
    %15 = tpu.matmul %3, %6, %cst_16 {dimension_numbers = #tpu.dot_dimension_numbers<[1], [0], [0], [1], [0, 0, 1, 1], [], []>} : vector<8x128xf32>, vector<128x128xf32>, vector<8x128xf32> -> vector<8x128xf32>
    %16 = arith.addf %14, %15 : vector<8x128xf32>
    %17 = arith.addf %13, %16 : vector<8x128xf32>
    %c0_17 = arith.constant 0 : index
    %c0_18 = arith.constant 0 : index
    %18 = vector.load %arg10[%c0_17, %c0_18] : memref<8x128xf32, #tpu.memory_space<vmem>>, vector<8x128xf32>
    tpu.vector_store %arg10[%c0_17, %c0_18], %17 {strides = array<i32>} : memref<8x128xf32, #tpu.memory_space<vmem>>, vector<8x128xf32>,
    return
  }
  func.func @transform_0(%arg0: i32, %arg1: i32, %arg2: i32) -> (i32, i32) {
    %c0_i32 = arith.constant 0 : i32
    return %arg0, %arg2 : i32, i32
  }
  func.func @transform_1(%arg0: i32, %arg1: i32, %arg2: i32) -> (i32, i32) {
    %c0_i32 = arith.constant 0 : i32
    return %arg0, %arg2 : i32, i32
  }
  func.func @transform_2(%arg0: i32, %arg1: i32, %arg2: i32) -> (i32, i32) {
    %c0_i32 = arith.constant 0 : i32
    return %arg2, %arg1 : i32, i32
  }
  func.func @transform_3(%arg0: i32, %arg1: i32, %arg2: i32) -> (i32, i32) {
    %c0_i32 = arith.constant 0 : i32
    return %arg2, %arg1 : i32, i32
  }
  func.func @transform_4(%arg0: i32, %arg1: i32, %arg2: i32) -> (i32, i32) {
    %c0_i32 = arith.constant 0 : i32
    %c0_i32_0 = arith.constant 0 : i32
    return %c0_i32, %arg1 : i32, i32
  }
  func.func @transform_5(%arg0: i32, %arg1: i32, %arg2: i32) -> (i32, i32) {
    %c0_i32 = arith.constant 0 : i32
    %c0_i32_0 = arith.constant 0 : i32
    return %c0_i32, %arg1 : i32, i32
  }
  func.func @transform_6(%arg0: i32, %arg1: i32, %arg2: i32) -> (i32, i32) {
    %c0_i32 = arith.constant 0 : i32
    return %arg0, %arg1 : i32, i32
  }
  func.func @transform_7(%arg0: i32, %arg1: i32, %arg2: i32) -> (i32, i32) {
    %c0_i32 = arith.constant 0 : i32
    return %arg0, %arg1 : i32, i32
  }
}

</mosaic_0001>

<llo_original>
// kernel: _complex_linear_planar.1
$region0: #{_complex_linear_planar.1}
  #allocation0 [shape = 'u32[]', space=smem, size = 0x4, offset = 0x4, fixed_abs, tag = 'smem constant byte address 0x4 - core index']
  #allocation1 [shape = 'u32[72,128]{1,0:T(1,128)}', space=vmem, size = 0x9000, scoped, tag = 'internal scratch']
  %s0 = inlined_call_operand.vmem [shape: f32[8,128], index: 0, kind: input, shape index: {}]
  %s1 = inlined_call_operand.vmem [shape: f32[8,128], index: 1, kind: input, shape index: {}]
  %s2 = inlined_call_operand.hbm [shape: f32[128,128], index: 2, kind: input, shape index: {}]
  %s3 = inlined_call_operand.hbm [shape: f32[128,128], index: 3, kind: input, shape index: {}]
  %s4 = inlined_call_operand.vmem [shape: f32[1,128], index: 4, kind: input, shape index: {}]
  %s5 = inlined_call_operand.vmem [shape: f32[1,128], index: 5, kind: input, shape index: {}]
  %s6 = inlined_call_operand.hbm [shape: f32[8,128], index: 6, kind: output, shape index: {0}]
  %s7 = inlined_call_operand.hbm [shape: f32[8,128], index: 7, kind: output, shape index: {1}]
  %8 = xla_tuple %s6, %s7
  %s9 = sld [smem:[#allocation0]]
  $region54: #{_complex_linear_planar.1} parent=0
    _
  %s11 = ssub.s32 1, %s9
  %s12 = scalar_select 0, %s11, %s9
  $region1: #{_complex_linear_planar.1} parent=0
    #allocation2 [shape = 'u8[65536]{0}', space=vmem, size = 0x10000, scoped, tag = 'input window, operand 2, single buffered']
    #allocation3 [shape = 's32[1]{0}', space=sflag, size = 0x4, scoped, tag = 'scoped memory for _complex_linear_planar.1']
    #allocation4 [shape = 's32[1]{0}', space=sflag, size = 0x4, scoped, tag = 'scoped memory for _complex_linear_planar.1']
    #allocation5 [shape = 'u8[65536]{0}', space=vmem, size = 0x10000, scoped, tag = 'input window, operand 3, single buffered']
    #allocation6 [shape = 's32[1]{0}', space=sflag, size = 0x4, scoped, tag = 'scoped memory for _complex_linear_planar.1']
    #allocation7 [shape = 'u8[4096]{0}', space=vmem, size = 0x1000, scoped, tag = 'output window, operand 0, single buffered']
    #allocation8 [shape = 'u8[4096]{0}', space=vmem, size = 0x1000, scoped, tag = 'output window, operand 1, single buffered']
    #allocation9 [shape = 's32[1]{0}', space=sflag, size = 0x4, scoped, tag = 'scoped memory for _complex_linear_planar.1']
    %13 = vsyncpa [#allocation3], 0
    %14 = vsyncpa [#allocation6], 0
    %15 = vsyncpa [#allocation4], 0
    %16 = vsyncpa [#allocation9], 0
    // Predicated region
    $region2: #{_complex_linear_planar.1} parent=1 // pred_check
      _
    $region3: #{_complex_linear_planar.1} parent=1 // pred_check_branch
      %18 = sbr.rel (0) target = $region5
    $region4: #{_complex_linear_planar.1} parent=1 // pred_region
      _
    $region5: #{_complex_linear_planar.1} parent=1 // pred_fallthru
      _
    // Predicated region
    $region6: #{_complex_linear_planar.1} parent=1 // pred_check
      _
    $region7: #{_complex_linear_planar.1} parent=1 // pred_check_branch
      %20 = sbr.rel (0) target = $region9
    $region8: #{_complex_linear_planar.1} parent=1 // pred_region
      _
    $region9: #{_complex_linear_planar.1} parent=1 // pred_fallthru
      _
    // Predicated region
    $region10: #{_complex_linear_planar.1} parent=1 // pred_check
      _
    $region11: #{_complex_linear_planar.1} parent=1 // pred_check_branch
      %22 = sbr.rel (0) target = $region13
    $region12: #{_complex_linear_planar.1} parent=1 // pred_region
      %24 = vsyncadd [#allocation3], 0
      %s25 = sshll.u32 %s2, 4
      %s26 = int_to_ptr.hbm [resolvable:$true] %s25
      %s27 = sshll.u32 [#allocation2], 4
      %s28 = int_to_ptr.vmem [resolvable:$true] %s27
      %33 = dma.hbm_to_vmem [thread:$0]  %s26, 2048, %s28, [#allocation3], 128, 128, 8
    $region13: #{_complex_linear_planar.1} parent=1 // pred_fallthru
      _
    // Predicated region
    $region14: #{_complex_linear_planar.1} parent=1 // pred_check
      _
    $region15: #{_complex_linear_planar.1} parent=1 // pred_check_branch
      %35 = sbr.rel (0) target = $region17
    $region16: #{_complex_linear_planar.1} parent=1 // pred_region
      %37 = vsyncadd [#allocation6], 0
      %s38 = sshll.u32 %s3, 4
      %s39 = int_to_ptr.hbm [resolvable:$true] %s38
      %s40 = sshll.u32 [#allocation5], 4
      %s41 = int_to_ptr.vmem [resolvable:$true] %s40
      %46 = dma.hbm_to_vmem [thread:$0]  %s39, 2048, %s41, [#allocation6], 128, 128, 8
    $region17: #{_complex_linear_planar.1} parent=1 // pred_fallthru
      _
    // Predicated region
    $region18: #{_complex_linear_planar.1} parent=1 // pred_check
      _
    $region19: #{_complex_linear_planar.1} parent=1 // pred_check_branch
      %48 = sbr.rel (0) target = $region21
    $region20: #{_complex_linear_planar.1} parent=1 // pred_region
      _
    $region21: #{_complex_linear_planar.1} parent=1 // pred_fallthru
      _
    // Predicated region
    $region22: #{_complex_linear_planar.1} parent=1 // pred_check
      _
    $region23: #{_complex_linear_planar.1} parent=1 // pred_check_branch
      %50 = sbr.rel (0) target = $region25
    $region24: #{_complex_linear_planar.1} parent=1 // pred_region
      _
    $region25: #{_complex_linear_planar.1} parent=1 // pred_fallthru
      _
    // Predicated region
    $region26: #{_complex_linear_planar.1} parent=1 // pred_check
      _
    $region27: #{_complex_linear_planar.1} parent=1 // pred_check_branch
      %52 = sbr.rel (0) target = $region29
    $region28: #{_complex_linear_planar.1} parent=1 // pred_region
      %54 = dma.done [#allocation3], 2048
    $region29: #{_complex_linear_planar.1} parent=1 // pred_fallthru
      _
    // Predicated region
    $region30: #{_complex_linear_planar.1} parent=1 // pred_check
      _
    $region31: #{_complex_linear_planar.1} parent=1 // pred_check_branch
      %56 = sbr.rel (0) target = $region33
    $region32: #{_complex_linear_planar.1} parent=1 // pred_region
      %58 = dma.done [#allocation6], 2048
    $region33: #{_complex_linear_planar.1} parent=1 // pred_fallthru
      _
    %p59 = scmp.eq.s32.totalorder 0, 0
    // Predicated region
    $region34: #{_complex_linear_planar.1} parent=1 // pred_check
      %p60 = pneg %p59
    $region35: #{_complex_linear_planar.1} parent=1 // pred_check_branch
      %62 = sbr.rel (%p60) target = $region37
    $region36: #{_complex_linear_planar.1} parent=1 // pred_region
      %v63 = vld [vmem:[%s4] sm:$0x1]
      %v65 = vperm.slane %v63, 0
      %67 = vst [vmem:[#allocation7] sm:$0xff] %v65
      %v68 = vld [vmem:[%s5] sm:$0x1]
      %v70 = vperm.slane %v68, 0
      %72 = vst [vmem:[#allocation8] sm:$0xff] %v70
    $region37: #{_complex_linear_planar.1} parent=1 // pred_fallthru
      _
    %v73 = vld [vmem:[%s0] sm:$0xff]
    %v74 = vld [vmem:[%s1] sm:$0xff]
    %v75 = vld [vmem:[#allocation2] sm:$0xff]
    %v76 = vld [vmem:[#allocation2 + $0x8] sm:$0xff]
    %v77 = vld [vmem:[#allocation2 + $0x10] sm:$0xff]
    %v78 = vld [vmem:[#allocation2 + $0x18] sm:$0xff]
    %v79 = vld [vmem:[#allocation2 + $0x20] sm:$0xff]
    %v80 = vld [vmem:[#allocation2 + $0x28] sm:$0xff]
    %v81 = vld [vmem:[#allocation2 + $0x30] sm:$0xff]
    %v82 = vld [vmem:[#allocation2 + $0x38] sm:$0xff]
    %v83 = vld [vmem:[#allocation2 + $0x40] sm:$0xff]
    %v84 = vld [vmem:[#allocation2 + $0x48] sm:$0xff]
    %v85 = vld [vmem:[#allocation2 + $0x50] sm:$0xff]
    %v86 = vld [vmem:[#allocation2 + $0x58] sm:$0xff]
    %v87 = vld [vmem:[#allocation2 + $0x60] sm:$0xff]
    %v88 = vld [vmem:[#allocation2 + $0x68] sm:$0xff]
    %v89 = vld [vmem:[#allocation2 + $0x70] sm:$0xff]
    %v90 = vld [vmem:[#allocation2 + $0x78] sm:$0xff]
    %v91 = vld [vmem:[#allocation5] sm:$0xff]
    %v92 = vld [vmem:[#allocation5 + $0x8] sm:$0xff]
    %v93 = vld [vmem:[#allocation5 + $0x10] sm:$0xff]
    %v94 = vld [vmem:[#allocation5 + $0x18] sm:$0xff]
    %v95 = vld [vmem:[#allocation5 + $0x20] sm:$0xff]
    %v96 = vld [vmem:[#allocation5 + $0x28] sm:$0xff]
    %v97 = vld [vmem:[#allocation5 + $0x30] sm:$0xff]
    %v98 = vld [vmem:[#allocation5 + $0x38] sm:$0xff]
    %v99 = vld [vmem:[#allocation5 + $0x40] sm:$0xff]
    %v100 = vld [vmem:[#allocation5 + $0x48] sm:$0xff]
    %v101 = vld [vmem:[#allocation5 + $0x50] sm:$0xff]
    %v102 = vld [vmem:[#allocation5 + $0x58] sm:$0xff]
    %v103 = vld [vmem:[#allocation5 + $0x60] sm:$0xff]
    %v104 = vld [vmem:[#allocation5 + $0x68] sm:$0xff]
    %v105 = vld [vmem:[#allocation5 + $0x70] sm:$0xff]
    %v106 = vld [vmem:[#allocation5 + $0x78] sm:$0xff]
    %v107 = vld [vmem:[#allocation7] sm:$0xff]
    %108 = vmatpush.msra.mxu0 %v90
    %109 = vmatpush.msra.mxu0 %v89
    %110 = vmatpush.msra.mxu0 %v88
    %111 = vmatpush.msra.mxu0 %v87
    %112 = vmatpush.msra.mxu0 %v86
    %113 = vmatpush.msra.mxu0 %v85
    %114 = vmatpush.msra.mxu0 %v84
    %115 = vmatpush.msra.mxu0 %v83
    %116 = vmatpush.msra.mxu0 %v82
    %117 = vmatpush.msra.mxu0 %v81
    %118 = vmatpush.msra.mxu0 %v80
    %119 = vmatpush.msra.mxu0 %v79
    %120 = vmatpush.msra.mxu0 %v78
    %121 = vmatpush.msra.mxu0 %v77
    %122 = vmatpush.msra.mxu0 %v76
    %123 = vmatpush.msra.mxu0 %v75
    %124 = vmatmul.f32.gmra.mxu0 %v73
    %v125 = vpop.f32.mrf.mxu0
    %v126 = vadd.f32 0.0, %v125
    %127 = vdwg.mxu0
    %128 = vmatpush.msra.mxu0 %v106
    %129 = vmatpush.msra.mxu0 %v105
    %130 = vmatpush.msra.mxu0 %v104
    %131 = vmatpush.msra.mxu0 %v103
    %132 = vmatpush.msra.mxu0 %v102
    %133 = vmatpush.msra.mxu0 %v101
    %134 = vmatpush.msra.mxu0 %v100
    %135 = vmatpush.msra.mxu0 %v99
    %136 = vmatpush.msra.mxu0 %v98
    %137 = vmatpush.msra.mxu0 %v97
    %138 = vmatpush.msra.mxu0 %v96
    %139 = vmatpush.msra.mxu0 %v95
    %140 = vmatpush.msra.mxu0 %v94
    %141 = vmatpush.msra.mxu0 %v93
    %142 = vmatpush.msra.mxu0 %v92
    %143 = vmatpush.msra.mxu0 %v91
    %144 = vmatmul.f32.gmra.mxu0 %v74
    %v145 = vpop.f32.mrf.mxu0
    %v146 = vadd.f32 0.0, %v145
    %147 = vdwg.mxu0
    %v148 = vsub.f32 %v126, %v146
    %v149 = vadd.f32 %v107, %v148
    %150 = vst [vmem:[#allocation7] sm:$0xff] %v149
    %v151 = vld [vmem:[#allocation8] sm:$0xff]
    %152 = vmatpush.msra.mxu0 %v106
    %153 = vmatpush.msra.mxu0 %v105
    %154 = vmatpush.msra.mxu0 %v104
    %155 = vmatpush.msra.mxu0 %v103
    %156 = vmatpush.msra.mxu0 %v102
    %157 = vmatpush.msra.mxu0 %v101
    %158 = vmatpush.msra.mxu0 %v100
    %159 = vmatpush.msra.mxu0 %v99
    %160 = vmatpush.msra.mxu0 %v98
    %161 = vmatpush.msra.mxu0 %v97
    %162 = vmatpush.msra.mxu0 %v96
    %163 = vmatpush.msra.mxu0 %v95
    %164 = vmatpush.msra.mxu0 %v94
    %165 = vmatpush.msra.mxu0 %v93
    %166 = vmatpush.msra.mxu0 %v92
    %167 = vmatpush.msra.mxu0 %v91
    %168 = vmatmul.f32.gmra.mxu0 %v73
    %v169 = vpop.f32.mrf.mxu0
    %v170 = vadd.f32 0.0, %v169
    %171 = vdwg.mxu0
    %172 = vmatpush.msra.mxu0 %v90
    %173 = vmatpush.msra.mxu0 %v89
    %174 = vmatpush.msra.mxu0 %v88
    %175 = vmatpush.msra.mxu0 %v87
    %176 = vmatpush.msra.mxu0 %v86
    %177 = vmatpush.msra.mxu0 %v85
    %178 = vmatpush.msra.mxu0 %v84
    %179 = vmatpush.msra.mxu0 %v83
    %180 = vmatpush.msra.mxu0 %v82
    %181 = vmatpush.msra.mxu0 %v81
    %182 = vmatpush.msra.mxu0 %v80
    %183 = vmatpush.msra.mxu0 %v79
    %184 = vmatpush.msra.mxu0 %v78
    %185 = vmatpush.msra.mxu0 %v77
    %186 = vmatpush.msra.mxu0 %v76
    %187 = vmatpush.msra.mxu0 %v75
    %188 = vmatmul.f32.gmra.mxu0 %v74
    %v189 = vpop.f32.mrf.mxu0
    %v190 = vadd.f32 %v170, %v189
    %191 = vdwg.mxu0
    %v192 = vadd.f32 %v151, %v190
    %193 = vst [vmem:[#allocation8] sm:$0xff] %v192
    // Predicated region
    $region38: #{_complex_linear_planar.1} parent=1 // pred_check
      _
    $region39: #{_complex_linear_planar.1} parent=1 // pred_check_branch
      %195 = sbr.rel (0) target = $region41
    $region40: #{_complex_linear_planar.1} parent=1 // pred_region
      %197 = vsyncadd [#allocation4], 0
      %s199 = sshll.u32 [#allocation7], 4
      %s200 = int_to_ptr.vmem [resolvable:$true] %s199
      %s201 = sshll.u32 %s6, 4
      %s202 = int_to_ptr.hbm [resolvable:$true] %s201
      %204 = dma.vmem_to_hbm [thread:$0]  %s200, 128, %s202, [#allocation4]
    $region41: #{_complex_linear_planar.1} parent=1 // pred_fallthru
      _
    // Predicated region
    $region42: #{_complex_linear_planar.1} parent=1 // pred_check
      _
    $region43: #{_complex_linear_planar.1} parent=1 // pred_check_branch
      %206 = sbr.rel (0) target = $region45
    $region44: #{_complex_linear_planar.1} parent=1 // pred_region
      %208 = vsyncadd [#allocation9], 0
      %s210 = sshll.u32 [#allocation8], 4
      %s211 = int_to_ptr.vmem [resolvable:$true] %s210
      %s212 = sshll.u32 %s7, 4
      %s213 = int_to_ptr.hbm [resolvable:$true] %s212
      %215 = dma.vmem_to_hbm [thread:$0]  %s211, 128, %s213, [#allocation9]
    $region45: #{_complex_linear_planar.1} parent=1 // pred_fallthru
      _
    // Predicated region
    $region46: #{_complex_linear_planar.1} parent=1 // pred_check
      _
    $region47: #{_complex_linear_planar.1} parent=1 // pred_check_branch
      %217 = sbr.rel (0) target = $region49
    $region48: #{_complex_linear_planar.1} parent=1 // pred_region
      %219 = dma.done [#allocation4], 128
    $region49: #{_complex_linear_planar.1} parent=1 // pred_fallthru
      _
    // Predicated region
    $region50: #{_complex_linear_planar.1} parent=1 // pred_check
      _
    $region51: #{_complex_linear_planar.1} parent=1 // pred_check_branch
      %221 = sbr.rel (0) target = $region53
    $region52: #{_complex_linear_planar.1} parent=1 // pred_region
      %223 = dma.done [#allocation9], 128
    $region53: #{_complex_linear_planar.1} parent=1 // pred_fallthru
      _
    %224 = vsyncpa [#allocation3], 1
    %225 = vsyncpa [#allocation6], 1
    %226 = vsyncpa [#allocation4], 1
    %227 = vsyncpa [#allocation9], 1

</llo_original>
